<compile_context>
chip_gen: v7x
topology: tpu7x:2x2x1
jax: 0.10.0
libtpu: 0.0.40
codegen_flags: <defaults>
</compile_context>

<pallas_src>
import jax
import jax.numpy as jnp
from jax.experimental import pallas as pl
from jax.experimental.pallas import tpu as pltpu


def _layernorm_kernel(x_ref, gamma_ref, beta_ref, o_ref):
    # One grid step processes a (tile_rows, D) slab resident in VMEM.
    x = x_ref[...].astype(jnp.float32)                        # (tile_rows, D)
    d = x.shape[-1]

    mean = jnp.sum(x, axis=-1, keepdims=True) * (1.0 / d)     # (tile_rows, 1)
    centered = x - mean                                        # (tile_rows, D)
    # PyTorch x.std(dim=-1) is the UNBIASED (N-1) estimator.
    # TODO(synk): d == 1 is degenerate (division by zero), matching torch's nan.
    var = jnp.sum(centered * centered, axis=-1, keepdims=True) * (1.0 / (d - 1))
    std = jnp.sqrt(var)

    # Exact per-row inverse (only a (tile_rows, 1) column -> cheap); the
    # normalize over the full (tile_rows, D) tile is a broadcast multiply.
    inv = 1.0 / (std + 1e-6)

    out = centered * inv
    out = gamma_ref[...].astype(jnp.float32) * out + beta_ref[...].astype(jnp.float32)
    o_ref[...] = out.astype(o_ref.dtype)


def _choose_tile_rows(rows, d, itemsize,
                      max_tile_rows=2048,
                      pipeline_budget_bytes=16 * 1024 * 1024):
    """Largest multiple-of-8 row tile whose double-buffered in+out fits the budget.

    Budget counts 2 input buffers + 2 output buffers of (tile_rows, d); 16 MiB is
    conservative for v7x's 32 MiB scoped / 64 MiB physical VMEM while still giving
    tiles big enough to sit at the HBM roofline on v5e/v6e.
    """
    per_row_bytes = 4 * d * itemsize                # 4 pipeline buffers per row
    t = pipeline_budget_bytes // per_row_bytes
    t = min(t, max_tile_rows)
    t = max(8, (t // 8) * 8)
    rows_padded8 = ((rows + 7) // 8) * 8            # never tile past the data
    return max(8, min(t, rows_padded8))


def layer_norm(x, gamma, beta, *, tile_rows=None):
    """x: (..., D); gamma/beta: (D,). Returns same shape/dtype as x."""
    orig_shape = x.shape
    d = orig_shape[-1]
    x2 = x.reshape(-1, d)                            # (rows, D)
    rows = x2.shape[0]

    if tile_rows is None:
        tile_rows = _choose_tile_rows(rows, d, jnp.dtype(x.dtype).itemsize)

    # Pad rows up to a multiple of the tile instead of collapsing to one block.
    # Zero pad rows normalize to zero (no NaN/Inf) and are sliced off below.
    padded_rows = ((rows + tile_rows - 1) // tile_rows) * tile_rows
    if padded_rows != rows:
        x2 = jnp.pad(x2, ((0, padded_rows - rows), (0, 0)))

    grid = (padded_rows // tile_rows,)

    gamma2 = gamma.reshape(1, d).astype(jnp.float32)
    beta2 = beta.reshape(1, d).astype(jnp.float32)

    out = pl.pallas_call(
        _layernorm_kernel,
        out_shape=jax.ShapeDtypeStruct((padded_rows, d), x.dtype),
        grid_spec=pltpu.PrefetchScalarGridSpec(
            num_scalar_prefetch=0,
            grid=grid,
            in_specs=[
                pl.BlockSpec((tile_rows, d), lambda i: (i, 0)),
                # Constant index_map: gamma/beta blocks stay resident; no
                # per-step re-fetch of the (1, D) params.
                pl.BlockSpec((1, d), lambda i: (0, 0)),
                pl.BlockSpec((1, d), lambda i: (0, 0)),
            ],
            out_specs=pl.BlockSpec((tile_rows, d), lambda i: (i, 0)),
        ),
        compiler_params=pltpu.CompilerParams(
            dimension_semantics=("parallel",),          # rows shard across TCs (v7x)
            vmem_limit_bytes=48 * 1024 * 1024,          # > v5e/v6e defaults, < v7x physical
        ),
    )(x2, gamma2, beta2)

    if padded_rows != rows:
        out = out[:rows]
    return out.reshape(orig_shape)


if __name__ == "__main__":
    embedding_dim = 128
    key = jax.random.PRNGKey(0)

    # nn.Parameter(torch.ones/zeros(embedding_dim))
    gamma = jnp.ones((embedding_dim,), dtype=jnp.float32)
    beta = jnp.zeros((embedding_dim,), dtype=jnp.float32)

    def ref_layer_norm(x):
        mean = jnp.mean(x, axis=-1, keepdims=True)
        var = jnp.sum((x - mean) ** 2, axis=-1, keepdims=True) / (x.shape[-1] - 1)
        return gamma * ((x - mean) / (jnp.sqrt(var) + 1e-6)) + beta

    # Module-like shape (batch=2, seq=8, D=128) plus a ragged row count (3*5=15)
    # to exercise the padding path.
    for shape in [(2, 8, embedding_dim), (3, 5, embedding_dim)]:
        key, sub = jax.random.split(key)
        x = jax.random.normal(sub, shape, dtype=jnp.float32)

        out = jax.block_until_ready(layer_norm(x, gamma, beta))
        ref = ref_layer_norm(x)

        assert out.shape == x.shape
        assert jnp.allclose(out, ref, atol=1e-4, rtol=1e-4), (
            shape, float(jnp.max(jnp.abs(out - ref))))

    print("KERNEL_OK")
</pallas_src>

<mosaic_0001>
module attributes {stable_mosaic.version = 11 : i64} {
  func.func @_layernorm_kernel(%arg0: i32, %arg1: memref<16x128xf32, #tpu.memory_space<vmem>>, %arg2: memref<1x128xf32, #tpu.memory_space<vmem>>, %arg3: memref<1x128xf32, #tpu.memory_space<vmem>>, %arg4: memref<16x128xf32, #tpu.memory_space<vmem>>) attributes {dimension_semantics = [#tpu.dimension_semantics<parallel>], iteration_bounds = array<i64: 1>, scalar_prefetch = 0 : i64, scratch_operands = 0 : i64, tpu.core_type = #tpu.core_type<tc>, window_params = [{transform_indices = @transform_0, window_bounds = array<i64: 16, 128>}, {pipeline_mode = #tpu.pipeline_mode<synchronous>, transform_indices = @transform_1, window_bounds = array<i64: 1, 128>}, {pipeline_mode = #tpu.pipeline_mode<synchronous>, transform_indices = @transform_2, window_bounds = array<i64: 1, 128>}, {transform_indices = @transform_3, window_bounds = array<i64: 16, 128>}]} {
    %c0 = arith.constant 0 : index
    %c0_0 = arith.constant 0 : index
    %0 = vector.load %arg1[%c0, %c0_0] : memref<16x128xf32, #tpu.memory_space<vmem>>, vector<16x128xf32>
    %cst = arith.constant dense<0.000000e+00> : vector<16xf32>
    %1 = vector.multi_reduction <add>, %0, %cst [1] : vector<16x128xf32> to vector<16xf32>
    %2 = vector.shape_cast %1 : vector<16xf32> to vector<16x1xf32>
    %cst_1 = arith.constant 7.812500e-03 : f32
    %3 = vector.broadcast %cst_1 : f32 to vector<16x1xf32>
    %4 = arith.mulf %2, %3 : vector<16x1xf32>
    %5 = vector.broadcast %4 : vector<16x1xf32> to vector<16x128xf32>
    %6 = arith.subf %0, %5 : vector<16x128xf32>
    %7 = arith.mulf %6, %6 : vector<16x128xf32>
    %cst_2 = arith.constant dense<0.000000e+00> : vector<16xf32>
    %8 = vector.multi_reduction <add>, %7, %cst_2 [1] : vector<16x128xf32> to vector<16xf32>
    %9 = vector.shape_cast %8 : vector<16xf32> to vector<16x1xf32>
    %cst_3 = arith.constant 0.00787401571 : f32
    %10 = vector.broadcast %cst_3 : f32 to vector<16x1xf32>
    %11 = arith.mulf %9, %10 : vector<16x1xf32>
    %12 = math.sqrt %11 : vector<16x1xf32>
    %cst_4 = arith.constant 9.99999997E-7 : f32
    %13 = vector.broadcast %cst_4 : f32 to vector<16x1xf32>
    %14 = arith.addf %12, %13 : vector<16x1xf32>
    %cst_5 = arith.constant 1.000000e+00 : f32
    %15 = vector.broadcast %cst_5 : f32 to vector<16x1xf32>
    %16 = arith.divf %15, %14 : vector<16x1xf32>
    %17 = vector.broadcast %16 : vector<16x1xf32> to vector<16x128xf32>
    %18 = arith.mulf %6, %17 : vector<16x128xf32>
    %c0_6 = arith.constant 0 : index
    %c0_7 = arith.constant 0 : index
    %19 = vector.load %arg2[%c0_6, %c0_7] : memref<1x128xf32, #tpu.memory_space<vmem>>, vector<1x128xf32>
    %20 = vector.broadcast %19 : vector<1x128xf32> to vector<16x128xf32>
    %21 = arith.mulf %20, %18 : vector<16x128xf32>
    %c0_8 = arith.constant 0 : index
    %c0_9 = arith.constant 0 : index
    %22 = vector.load %arg3[%c0_8, %c0_9] : memref<1x128xf32, #tpu.memory_space<vmem>>, vector<1x128xf32>
    %23 = vector.broadcast %22 : vector<1x128xf32> to vector<16x128xf32>
    %24 = arith.addf %21, %23 : vector<16x128xf32>
    %c0_10 = arith.constant 0 : index
    %c0_11 = arith.constant 0 : index
    %25 = vector.load %arg4[%c0_10, %c0_11] : memref<16x128xf32, #tpu.memory_space<vmem>>, vector<16x128xf32>
    tpu.vector_store %arg4[%c0_10, %c0_11], %24 {strides = array<i32>} : memref<16x128xf32, #tpu.memory_space<vmem>>, vector<16x128xf32>,
    return
  }
  func.func @transform_0(%arg0: i32) -> (i32, i32) {
    %c0_i32 = arith.constant 0 : i32
    %c0_i32_0 = arith.constant 0 : i32
    return %arg0, %c0_i32 : i32, i32
  }
  func.func @transform_1(%arg0: i32) -> (i32, i32) {
    %c0_i32 = arith.constant 0 : i32
    %c0_i32_0 = arith.constant 0 : i32
    %c0_i32_1 = arith.constant 0 : i32
    return %c0_i32, %c0_i32_0 : i32, i32
  }
  func.func @transform_2(%arg0: i32) -> (i32, i32) {
    %c0_i32 = arith.constant 0 : i32
    %c0_i32_0 = arith.constant 0 : i32
    %c0_i32_1 = arith.constant 0 : i32
    return %c0_i32, %c0_i32_0 : i32, i32
  }
  func.func @transform_3(%arg0: i32) -> (i32, i32) {
    %c0_i32 = arith.constant 0 : i32
    %c0_i32_0 = arith.constant 0 : i32
    return %arg0, %c0_i32 : i32, i32
  }
}

</mosaic_0001>

<llo_original>
// kernel: tpu_custom_call.1
$region0: #{tpu_custom_call.1}
  #allocation0 [shape = 'u32[]', space=smem, size = 0x4, offset = 0x4, fixed_abs, tag = 'smem constant byte address 0x4 - core index']
  #allocation1 [shape = 'u32[144,128]{1,0:T(1,128)}', space=vmem, size = 0x12000, scoped, tag = 'internal scratch']
  %s0 = inlined_call_operand.hbm [shape: f32[16,128], index: 0, kind: input, shape index: {}]
  %s1 = inlined_call_operand.vmem [shape: f32[1,128], index: 1, kind: input, shape index: {}]
  %s2 = inlined_call_operand.vmem [shape: f32[1,128], index: 2, kind: input, shape index: {}]
  %s3 = inlined_call_operand.hbm [shape: f32[16,128], index: 3, kind: output, shape index: {}]
  %s4 = sld [smem:[#allocation0]]
  $region26: #{tpu_custom_call.1} parent=0
    _
  %s6 = ssub.s32 1, %s4
  %s7 = scalar_select 0, %s6, %s4
  $region1: #{tpu_custom_call.1} parent=0
    #allocation2 [shape = 'u8[8192]{0}', space=vmem, size = 0x2000, scoped, tag = 'input window, operand 0, single buffered']
    #allocation3 [shape = 's32[1]{0}', space=sflag, size = 0x4, scoped, tag = 'scoped memory for tpu_custom_call.1']
    #allocation4 [shape = 's32[1]{0}', space=sflag, size = 0x4, scoped, tag = 'scoped memory for tpu_custom_call.1']
    #allocation5 [shape = 'u8[8192]{0}', space=vmem, size = 0x2000, scoped, tag = 'output window, operand 0, single buffered']
    %8 = vsyncpa [#allocation3], 0
    %9 = vsyncpa [#allocation4], 0
    // Predicated region
    $region2: #{tpu_custom_call.1} parent=1 // pred_check
      _
    $region3: #{tpu_custom_call.1} parent=1 // pred_check_branch
      %11 = sbr.rel (0) target = $region5
    $region4: #{tpu_custom_call.1} parent=1 // pred_region
      %s13 = ssub.s32 256, 256
      %14 = vsyncadd [#allocation3], %s13
      %s15 = sshll.u32 [#allocation2], 4
      %s16 = int_to_ptr.vmem [resolvable:$true] %s15
      %21 = dma.hbm_to_vmem [thread:$0]  %s0, 256, %s16, [#allocation3], 128, 128, 8
    $region5: #{tpu_custom_call.1} parent=1 // pred_fallthru
      _
    // Predicated region
    $region6: #{tpu_custom_call.1} parent=1 // pred_check
      _
    $region7: #{tpu_custom_call.1} parent=1 // pred_check_branch
      %23 = sbr.rel (0) target = $region9
    $region8: #{tpu_custom_call.1} parent=1 // pred_region
      _
    $region9: #{tpu_custom_call.1} parent=1 // pred_fallthru
      _
    // Predicated region
    $region10: #{tpu_custom_call.1} parent=1 // pred_check
      _
    $region11: #{tpu_custom_call.1} parent=1 // pred_check_branch
      %25 = sbr.rel (0) target = $region13
    $region12: #{tpu_custom_call.1} parent=1 // pred_region
      _
    $region13: #{tpu_custom_call.1} parent=1 // pred_fallthru
      _
    // Predicated region
    $region14: #{tpu_custom_call.1} parent=1 // pred_check
      _
    $region15: #{tpu_custom_call.1} parent=1 // pred_check_branch
      %27 = sbr.rel (0) target = $region17
    $region16: #{tpu_custom_call.1} parent=1 // pred_region
      %28 = dma.done [#allocation3], 256
    $region17: #{tpu_custom_call.1} parent=1 // pred_fallthru
      _
    %v29 = vld [vmem:[#allocation2] sm:$0xff]
    %v30 = vld [vmem:[#allocation2 + $0x8] sm:$0xff]
    %31 = vadd.xlane.f32.xlu0 %v29
    %v32 = vpop.xlane.xlu0 %31
    %33 = vadd.xlane.f32.xlu0 %v30
    %v34 = vpop.xlane.xlu0 %33
    %v35 = vmul.f32 %v32, 0.0078125
    %v36 = vmul.f32 %v34, 0.0078125
    %v37 = vsub.f32 %v29, %v35
    %v38 = vsub.f32 %v30, %v36
    %v39 = vmul.f32 %v37, %v37
    %v40 = vmul.f32 %v38, %v38
    %41 = vadd.xlane.f32.xlu0 %v39
    %v42 = vpop.xlane.xlu0 %41
    %43 = vadd.xlane.f32.xlu0 %v40
    %v44 = vpop.xlane.xlu0 %43
    %v45 = vmul.f32 %v42, 0.007874016
    %v46 = vmul.f32 %v44, 0.007874016
    %v47 = vrsqrt.pop %v45
    %v48 = vmul.f32 %v45, %v47
    %vm49 = vcmp.eq.f32.partialorder %v45, inf
    %v50 = vsel %vm49, %v45, %v48
    %vm51 = vcmp.eq.f32.partialorder %v45, 0.0
    %v52 = vand.u32 %v45, 2147483648
    %v53 = vsel %vm51, %v52, %v50
    %v54 = vrsqrt.pop %v46
    %v55 = vmul.f32 %v46, %v54
    %vm56 = vcmp.eq.f32.partialorder %v46, inf
    %v57 = vsel %vm56, %v46, %v55
    %vm58 = vcmp.eq.f32.partialorder %v46, 0.0
    %v59 = vand.u32 %v46, 2147483648
    %v60 = vsel %vm58, %v59, %v57
    %v61 = vadd.f32 %v53, 1e-06
    %v62 = vadd.f32 %v60, 1e-06
    %v63 = vrcp.pop %v61
    %v64 = vmul.f32 1.0, %v63
    %v65 = vrcp.pop %v62
    %v66 = vmul.f32 1.0, %v65
    %v67 = vmul.f32 %v37, %v64
    %v68 = vmul.f32 %v38, %v66
    %v69 = vld [vmem:[%s1] sm:$0x1]
    %v71 = vlaneseq
    %v72 = vshrl.u32 %v71, 7
    %v73 = vsub.s32 0, %v72
    %v74 = vrot.slane %v69, %v73
    %v76 = vmul.f32 %v74, %v67
    %v77 = vmul.f32 %v74, %v68
    %v78 = vld [vmem:[%s2] sm:$0x1]
    %v80 = vlaneseq
    %v81 = vshrl.u32 %v80, 7
    %v82 = vsub.s32 0, %v81
    %v83 = vrot.slane %v78, %v82
    %v85 = vadd.f32 %v76, %v83
    %v86 = vadd.f32 %v77, %v83
    %87 = vst [vmem:[#allocation5] sm:$0xff] %v85
    %88 = vst [vmem:[#allocation5 + $0x8] sm:$0xff] %v86
    // Predicated region
    $region18: #{tpu_custom_call.1} parent=1 // pred_check
      _
    $region19: #{tpu_custom_call.1} parent=1 // pred_check_branch
      %90 = sbr.rel (0) target = $region21
    $region20: #{tpu_custom_call.1} parent=1 // pred_region
      %s92 = ssub.s32 256, 256
      %93 = vsyncadd [#allocation4], %s92
      %s94 = sshll.u32 [#allocation5], 4
      %s95 = int_to_ptr.vmem [resolvable:$true] %s94
      %100 = dma.vmem_to_hbm [thread:$0]  %s95, 256, %s3, [#allocation4], 128, 128, 8
    $region21: #{tpu_custom_call.1} parent=1 // pred_fallthru
      _
    // Predicated region
    $region22: #{tpu_custom_call.1} parent=1 // pred_check
      _
    $region23: #{tpu_custom_call.1} parent=1 // pred_check_branch
      %102 = sbr.rel (0) target = $region25
    $region24: #{tpu_custom_call.1} parent=1 // pred_region
      %103 = dma.done [#allocation4], 256
    $region25: #{tpu_custom_call.1} parent=1 // pred_fallthru
      _
    %104 = vsyncpa [#allocation3], 1
    %105 = vsyncpa [#allocation4], 1

</llo_original>
